<compile_context>
chip_gen: v7x
topology: tpu7x:2x2x1
jax: 0.10.0
libtpu: 0.0.40
codegen_flags: <defaults>
</compile_context>

<pallas_src>
import functools

import jax
import jax.numpy as jnp
from jax.experimental import pallas as pl
from jax.experimental.pallas import tpu as pltpu


def _round_up(n, m):
    return ((n + m - 1) // m) * m


def _cdiv(a, b):
    return -(-a // b)


def _make_kernel(F, F_pad, C, C_pad):
    """Builds the fused fc1->ReLU->fc2 kernel for the given (static) dims."""
    pad_k = F_pad > F

    def mlp_kernel(x_ref, w1_ref, b1_ref, w2_ref, b2_ref, o_ref, *scratch):
        if pad_k:
            (xpad_ref,) = scratch
            # Zero the staging tile every step (no cross-step state, safe under
            # megacore splitting), then drop the real F columns in as bf16.
            xpad_ref[...] = jnp.zeros_like(xpad_ref)
            xpad_ref[:, :F] = x_ref[...].astype(jnp.bfloat16)
            xb = xpad_ref[...]
        else:
            xb = x_ref[...].astype(jnp.bfloat16)

        # fc1: bf16 MXU matmul, f32 accumulation. Padded K lanes are exactly 0.
        h = jnp.dot(xb, w1_ref[...], preferred_element_type=jnp.float32)
        # bias + ReLU in f32 on the VPU (v5e has no bf16 VPU). Padded hidden
        # lanes stay exactly zero.
        h = jnp.maximum(h + b1_ref[...], 0.0)

        # fc2: cast activations to bf16 for the MXU, accumulate in f32.
        out = jnp.dot(h.astype(w2_ref.dtype), w2_ref[...],
                      preferred_element_type=jnp.float32)
        out = out + b2_ref[...]

        # Only the first C lanes are real -> narrow store (masked vst is fine,
        # vst slots have huge slack; HBM bytes drop ~C_pad/C x).
        if C_pad > C:
            out = out[:, :C]
        o_ref[...] = out.astype(o_ref.dtype)

    return mlp_kernel


def prepare_params(w1, b1, w2, b2):
    """Pad & cast weights once (outside the per-step forward).

    Weights are stored [in, out] (transpose of PyTorch's [out, in]) so the kernel
    computes plain x @ W + b.
    """
    F, H = w1.shape
    C = w2.shape[1]
    F_pad = _round_up(max(F, 8), 8)      # contraction dim -> full sublane group
    H_pad = _round_up(H, 128)            # hidden dim lane-dense
    C_pad = _round_up(C, 128)            # fc2 computed lane-dense, stored C-wide

    bf16 = jnp.bfloat16
    w1p = jnp.zeros((F_pad, H_pad), bf16).at[:F, :H].set(w1.astype(bf16))
    b1p = jnp.zeros((1, H_pad), jnp.float32).at[:, :H].set(
        b1.reshape(1, H).astype(jnp.float32))
    w2p = jnp.zeros((H_pad, C_pad), bf16).at[:H, :C].set(w2.astype(bf16))
    b2p = jnp.zeros((1, C_pad), jnp.float32).at[:, :C].set(
        b2.reshape(1, C).astype(jnp.float32))
    dims = (F, H, C)
    return (w1p, b1p, w2p, b2p), dims


def classifier_forward(x, prepared, *, tb_max=1024):
    """x: [B, F] f32, prepared = prepare_params(...) -> logits [B, C] f32."""
    (w1p, b1p, w2p, b2p), (F, H, C) = prepared
    B = x.shape[0]
    assert x.shape[1] == F
    F_pad, H_pad = w1p.shape
    C_pad = w2p.shape[1]

    # Balanced batch tiling: minimize padding, amortize per-step overhead, and
    # keep >=2 grid steps once B is large enough so v7x's 2nd TensorCore works.
    num_tiles = max(1, _cdiv(B, tb_max))
    if B >= 16 and num_tiles < 2:
        num_tiles = 2
    TB = _round_up(_cdiv(B, num_tiles), 8)
    B_pad = _round_up(B, TB)

    xin = x
    if B_pad != B:
        # Zero-pad the tail rows only when needed (not needed when TB | B).
        xin = jnp.zeros((B_pad, F), x.dtype).at[:B, :].set(x)

    scratch_shapes = []
    if F_pad > F:
        scratch_shapes.append(pltpu.VMEM((TB, F_pad), jnp.bfloat16))

    kernel = _make_kernel(F, F_pad, C, C_pad)

    flops = 2 * B_pad * (F_pad * H_pad + H_pad * C_pad)
    bytes_accessed = (xin.size * 4 + w1p.size * 2 + b1p.size * 4
                      + w2p.size * 2 + b2p.size * 4 + B_pad * C * 4)

    out = pl.pallas_call(
        kernel,
        out_shape=jax.ShapeDtypeStruct((B_pad, C), jnp.float32),
        grid_spec=pltpu.PrefetchScalarGridSpec(
            num_scalar_prefetch=0,
            grid=(B_pad // TB,),
            in_specs=[
                # x: tiled over the batch grid axis; last dim = full extent (F).
                pl.BlockSpec((TB, F), lambda i: (i, 0)),
                # weights / biases: constant index_map -> VMEM-resident.
                pl.BlockSpec((F_pad, H_pad), lambda i: (0, 0)),
                pl.BlockSpec((1, H_pad), lambda i: (0, 0)),
                pl.BlockSpec((H_pad, C_pad), lambda i: (0, 0)),
                pl.BlockSpec((1, C_pad), lambda i: (0, 0)),
            ],
            # Narrow (C-wide) output block: last dim = full extent (C).
            out_specs=pl.BlockSpec((TB, C), lambda i: (i, 0)),
            scratch_shapes=scratch_shapes,
        ),
        compiler_params=pltpu.CompilerParams(
            # Batch steps are independent -> megacore sharding on v7x.
            dimension_semantics=("parallel",),
            # Conservative scoped-VMEM budget; fits v5e/v6e (128 MiB) and v7x (64 MiB).
            vmem_limit_bytes=32 * 1024 * 1024,
        ),
        cost_estimate=pl.CostEstimate(
            flops=int(flops), transcendentals=0,
            bytes_accessed=int(bytes_accessed)),
    )(xin, w1p, b1p, w2p, b2p)

    return out if B_pad == B else out[:B]


def init_params(key, input_size, hidden_size, num_classes):
    """Deterministic init mirroring PyTorch nn.Linear default U(-1/sqrt(fan_in), +)."""
    k1, k2, k3, k4 = jax.random.split(key, 4)
    bound1 = 1.0 / jnp.sqrt(jnp.float32(input_size))
    bound2 = 1.0 / jnp.sqrt(jnp.float32(hidden_size))
    # Stored as [in, out] so the kernel uses x @ W.
    w1 = jax.random.uniform(k1, (input_size, hidden_size), jnp.float32, -bound1, bound1)
    b1 = jax.random.uniform(k2, (1, hidden_size), jnp.float32, -bound1, bound1)
    w2 = jax.random.uniform(k3, (hidden_size, num_classes), jnp.float32, -bound2, bound2)
    b2 = jax.random.uniform(k4, (1, num_classes), jnp.float32, -bound2, bound2)
    return w1, b1, w2, b2


def _reference(x, w1, b1, w2, b2):
    """Pure-JAX reference matching the kernel numerics (bf16 matmul operands,
    f32 accumulation, f32 bias/ReLU epilogue)."""
    f32 = jnp.float32
    xb = x.astype(jnp.bfloat16).astype(f32)
    w1b = w1.astype(jnp.bfloat16).astype(f32)
    w2b = w2.astype(jnp.bfloat16).astype(f32)
    h = jnp.maximum(xb @ w1b + b1, 0.0)
    hb = h.astype(jnp.bfloat16).astype(f32)
    return hb @ w2b + b2


if __name__ == "__main__":
    # Config implied by train.py: input_size=4 (F1..F4), hidden_size=64, num_classes=2.
    input_size, hidden_size, num_classes = 4, 64, 2

    key = jax.random.PRNGKey(0)
    kx, kp, kx2 = jax.random.split(key, 3)
    w1, b1, w2, b2 = init_params(kp, input_size, hidden_size, num_classes)
    prepared = prepare_params(w1, b1, w2, b2)
    jax.block_until_ready(prepared[0])   # weight pad/cast happens once, up front

    # Primary run: the shipped batch size (single grid step, single dispatch).
    batch = 8
    x = jax.random.normal(kx, (batch, input_size), jnp.float32)
    out = classifier_forward(x, prepared)
    out = jax.block_until_ready(out)
    assert out.shape == (batch, num_classes)
    ref = _reference(x, w1, b1, w2, b2)
    assert jnp.allclose(out, ref, atol=1e-3, rtol=1e-3), (
        f"max abs err {jnp.max(jnp.abs(out - ref))}")

    # Secondary run: batch not a multiple of the tile -> exercises balanced
    # tiling (grid=(2,), TB=16, B_pad=32) and the row-padding/slice path.
    batch2 = 24
    x2 = jax.random.normal(kx2, (batch2, input_size), jnp.float32)
    out2 = jax.block_until_ready(classifier_forward(x2, prepared))
    assert out2.shape == (batch2, num_classes)
    ref2 = _reference(x2, w1, b1, w2, b2)
    assert jnp.allclose(out2, ref2, atol=1e-3, rtol=1e-3), (
        f"max abs err {jnp.max(jnp.abs(out2 - ref2))}")

    print("KERNEL_OK")
</pallas_src>

<mosaic_0001>
module attributes {stable_mosaic.version = 11 : i64} {
  func.func @mlp_kernel(%arg0: i32, %arg1: memref<8x4xf32, #tpu.memory_space<vmem>>, %arg2: memref<8x128xbf16, #tpu.memory_space<vmem>>, %arg3: memref<1x128xf32, #tpu.memory_space<vmem>>, %arg4: memref<128x128xbf16, #tpu.memory_space<vmem>>, %arg5: memref<1x128xf32, #tpu.memory_space<vmem>>, %arg6: memref<8x2xf32, #tpu.memory_space<vmem>>, %arg7: memref<8x8xbf16, #tpu.memory_space<vmem>>) attributes {dimension_semantics = [#tpu.dimension_semantics<parallel>], iteration_bounds = array<i64: 1>, scalar_prefetch = 0 : i64, scratch_operands = 1 : i64, tpu.core_type = #tpu.core_type<tc>, window_params = [{transform_indices = @transform_0, window_bounds = array<i64: 8, 4>}, {pipeline_mode = #tpu.pipeline_mode<synchronous>, transform_indices = @transform_1, window_bounds = array<i64: 8, 128>}, {pipeline_mode = #tpu.pipeline_mode<synchronous>, transform_indices = @transform_2, window_bounds = array<i64: 1, 128>}, {pipeline_mode = #tpu.pipeline_mode<synchronous>, transform_indices = @transform_3, window_bounds = array<i64: 128, 128>}, {pipeline_mode = #tpu.pipeline_mode<synchronous>, transform_indices = @transform_4, window_bounds = array<i64: 1, 128>}, {transform_indices = @transform_5, window_bounds = array<i64: 8, 2>}]} {
    %cst = arith.constant 0.000000e+00 : bf16
    %0 = vector.broadcast %cst : bf16 to vector<8x8xbf16>
    %c0 = arith.constant 0 : index
    %c0_0 = arith.constant 0 : index
    %1 = vector.load %arg7[%c0, %c0_0] : memref<8x8xbf16, #tpu.memory_space<vmem>>, vector<8x8xbf16>
    tpu.vector_store %arg7[%c0, %c0_0], %0 {strides = array<i32>} : memref<8x8xbf16, #tpu.memory_space<vmem>>, vector<8x8xbf16>,
    %c0_1 = arith.constant 0 : index
    %c0_2 = arith.constant 0 : index
    %2 = vector.load %arg1[%c0_1, %c0_2] : memref<8x4xf32, #tpu.memory_space<vmem>>, vector<8x4xf32>
    %3 = arith.truncf %2 : vector<8x4xf32> to vector<8x4xbf16>
    %c0_3 = arith.constant 0 : index
    %c0_4 = arith.constant 0 : index
    %4 = vector.load %arg7[%c0_3, %c0_4] : memref<8x8xbf16, #tpu.memory_space<vmem>>, vector<8x4xbf16>
    tpu.vector_store %arg7[%c0_3, %c0_4], %3 {strides = array<i32>} : memref<8x8xbf16, #tpu.memory_space<vmem>>, vector<8x4xbf16>,
    %c0_5 = arith.constant 0 : index
    %c0_6 = arith.constant 0 : index
    %5 = vector.load %arg7[%c0_5, %c0_6] : memref<8x8xbf16, #tpu.memory_space<vmem>>, vector<8x8xbf16>
    %c0_7 = arith.constant 0 : index
    %c0_8 = arith.constant 0 : index
    %6 = vector.load %arg2[%c0_7, %c0_8] : memref<8x128xbf16, #tpu.memory_space<vmem>>, vector<8x128xbf16>
    %cst_9 = arith.constant dense<0.000000e+00> : vector<8x128xf32>
    %7 = tpu.matmul %5, %6, %cst_9 {dimension_numbers = #tpu.dot_dimension_numbers<[1], [0], [0], [1], [0, 0, 1, 1], [], []>} : vector<8x8xbf16>, vector<8x128xbf16>, vector<8x128xf32> -> vector<8x128xf32>
    %c0_10 = arith.constant 0 : index
    %c0_11 = arith.constant 0 : index
    %8 = vector.load %arg3[%c0_10, %c0_11] : memref<1x128xf32, #tpu.memory_space<vmem>>, vector<1x128xf32>
    %9 = vector.broadcast %8 : vector<1x128xf32> to vector<8x128xf32>
    %10 = arith.addf %7, %9 : vector<8x128xf32>
    %cst_12 = arith.constant 0.000000e+00 : f32
    %11 = vector.broadcast %cst_12 : f32 to vector<8x128xf32>
    %12 = arith.maximumf %10, %11 : vector<8x128xf32>
    %13 = arith.truncf %12 : vector<8x128xf32> to vector<8x128xbf16>
    %c0_13 = arith.constant 0 : index
    %c0_14 = arith.constant 0 : index
    %14 = vector.load %arg4[%c0_13, %c0_14] : memref<128x128xbf16, #tpu.memory_space<vmem>>, vector<128x128xbf16>
    %cst_15 = arith.constant dense<0.000000e+00> : vector<8x128xf32>
    %15 = tpu.matmul %13, %14, %cst_15 {dimension_numbers = #tpu.dot_dimension_numbers<[1], [0], [0], [1], [0, 0, 1, 1], [], []>} : vector<8x128xbf16>, vector<128x128xbf16>, vector<8x128xf32> -> vector<8x128xf32>
    %c0_16 = arith.constant 0 : index
    %c0_17 = arith.constant 0 : index
    %16 = vector.load %arg5[%c0_16, %c0_17] : memref<1x128xf32, #tpu.memory_space<vmem>>, vector<1x128xf32>
    %17 = vector.broadcast %16 : vector<1x128xf32> to vector<8x128xf32>
    %18 = arith.addf %15, %17 : vector<8x128xf32>
    %19 = vector.extract_strided_slice %18 {offsets = [0, 0], sizes = [8, 2], strides = [1, 1]} : vector<8x128xf32> to vector<8x2xf32>
    %c0_18 = arith.constant 0 : index
    %c0_19 = arith.constant 0 : index
    %20 = vector.load %arg6[%c0_18, %c0_19] : memref<8x2xf32, #tpu.memory_space<vmem>>, vector<8x2xf32>
    tpu.vector_store %arg6[%c0_18, %c0_19], %19 {strides = array<i32>} : memref<8x2xf32, #tpu.memory_space<vmem>>, vector<8x2xf32>,
    return
  }
  func.func @transform_0(%arg0: i32) -> (i32, i32) {
    %c0_i32 = arith.constant 0 : i32
    %c0_i32_0 = arith.constant 0 : i32
    return %arg0, %c0_i32 : i32, i32
  }
  func.func @transform_1(%arg0: i32) -> (i32, i32) {
    %c0_i32 = arith.constant 0 : i32
    %c0_i32_0 = arith.constant 0 : i32
    %c0_i32_1 = arith.constant 0 : i32
    return %c0_i32, %c0_i32_0 : i32, i32
  }
  func.func @transform_2(%arg0: i32) -> (i32, i32) {
    %c0_i32 = arith.constant 0 : i32
    %c0_i32_0 = arith.constant 0 : i32
    %c0_i32_1 = arith.constant 0 : i32
    return %c0_i32, %c0_i32_0 : i32, i32
  }
  func.func @transform_3(%arg0: i32) -> (i32, i32) {
    %c0_i32 = arith.constant 0 : i32
    %c0_i32_0 = arith.constant 0 : i32
    %c0_i32_1 = arith.constant 0 : i32
    return %c0_i32, %c0_i32_0 : i32, i32
  }
  func.func @transform_4(%arg0: i32) -> (i32, i32) {
    %c0_i32 = arith.constant 0 : i32
    %c0_i32_0 = arith.constant 0 : i32
    %c0_i32_1 = arith.constant 0 : i32
    return %c0_i32, %c0_i32_0 : i32, i32
  }
  func.func @transform_5(%arg0: i32) -> (i32, i32) {
    %c0_i32 = arith.constant 0 : i32
    %c0_i32_0 = arith.constant 0 : i32
    return %arg0, %c0_i32 : i32, i32
  }
}

</mosaic_0001>

<llo_original>
// kernel: tpu_custom_call.1
$region0: #{tpu_custom_call.1}
  #allocation0 [shape = 'u32[]', space=smem, size = 0x4, offset = 0x4, fixed_abs, tag = 'smem constant byte address 0x4 - core index']
  #allocation1 [shape = 'u32[144,128]{1,0:T(1,128)}', space=vmem, size = 0x12000, scoped, tag = 'internal scratch']
  #allocation2 [shape = 'bf16[8,8]{1,0:T(8,128)(2,1)}', space=vmem, size = 0x800, scoped, tag = 'scratch operand']
  %s0 = inlined_call_operand.vmem [shape: f32[8,4], index: 0, kind: input, shape index: {}]
  %s1 = inlined_call_operand.vmem [shape: bf16[8,128], index: 1, kind: input, shape index: {}]
  %s2 = inlined_call_operand.vmem [shape: f32[1,128], index: 2, kind: input, shape index: {}]
  %s3 = inlined_call_operand.hbm [shape: bf16[128,128], index: 3, kind: input, shape index: {}]
  %s4 = inlined_call_operand.vmem [shape: f32[1,128], index: 4, kind: input, shape index: {}]
  %s5 = inlined_call_operand.vmem [shape: f32[8,2], index: 5, kind: output, shape index: {}]
  %s6 = sld [smem:[#allocation0]]
  $region34: #{tpu_custom_call.1} parent=0
    _
  %s8 = ssub.s32 1, %s6
  %s9 = scalar_select 0, %s8, %s6
  $region1: #{tpu_custom_call.1} parent=0
    #allocation3 [shape = 'u8[32768]{0}', space=vmem, size = 0x8000, scoped, tag = 'input window, operand 3, single buffered']
    #allocation4 [shape = 's32[1]{0}', space=sflag, size = 0x4, scoped, tag = 'scoped memory for tpu_custom_call.1']
    %10 = vsyncpa [#allocation4], 0
    // Predicated region
    $region2: #{tpu_custom_call.1} parent=1 // pred_check
      _
    $region3: #{tpu_custom_call.1} parent=1 // pred_check_branch
      %12 = sbr.rel (0) target = $region5
    $region4: #{tpu_custom_call.1} parent=1 // pred_region
      _
    $region5: #{tpu_custom_call.1} parent=1 // pred_fallthru
      _
    // Predicated region
    $region6: #{tpu_custom_call.1} parent=1 // pred_check
      _
    $region7: #{tpu_custom_call.1} parent=1 // pred_check_branch
      %14 = sbr.rel (0) target = $region9
    $region8: #{tpu_custom_call.1} parent=1 // pred_region
      _
    $region9: #{tpu_custom_call.1} parent=1 // pred_fallthru
      _
    // Predicated region
    $region10: #{tpu_custom_call.1} parent=1 // pred_check
      _
    $region11: #{tpu_custom_call.1} parent=1 // pred_check_branch
      %16 = sbr.rel (0) target = $region13
    $region12: #{tpu_custom_call.1} parent=1 // pred_region
      _
    $region13: #{tpu_custom_call.1} parent=1 // pred_fallthru
      _
    // Predicated region
    $region14: #{tpu_custom_call.1} parent=1 // pred_check
      _
    $region15: #{tpu_custom_call.1} parent=1 // pred_check_branch
      %18 = sbr.rel (0) target = $region17
    $region16: #{tpu_custom_call.1} parent=1 // pred_region
      %s20 = ssub.s32 1024, 1024
      %21 = vsyncadd [#allocation4], %s20
      %s22 = sshll.u32 [#allocation3], 4
      %s23 = int_to_ptr.vmem [resolvable:$true] %s22
      %28 = dma.hbm_to_vmem [thread:$0]  %s3, 1024, %s23, [#allocation4], 64, 64, 4
    $region17: #{tpu_custom_call.1} parent=1 // pred_fallthru
      _
    // Predicated region
    $region18: #{tpu_custom_call.1} parent=1 // pred_check
      _
    $region19: #{tpu_custom_call.1} parent=1 // pred_check_branch
      %30 = sbr.rel (0) target = $region21
    $region20: #{tpu_custom_call.1} parent=1 // pred_region
      _
    $region21: #{tpu_custom_call.1} parent=1 // pred_fallthru
      _
    // Predicated region
    $region22: #{tpu_custom_call.1} parent=1 // pred_check
      _
    $region23: #{tpu_custom_call.1} parent=1 // pred_check_branch
      %32 = sbr.rel (0) target = $region25
    $region24: #{tpu_custom_call.1} parent=1 // pred_region
      %33 = dma.done [#allocation4], 1024
    $region25: #{tpu_custom_call.1} parent=1 // pred_fallthru
      _
    %vm35 = vcmask 60416
    %36 = vst.msk [vmem:[#allocation2] sm:$0xf] %vm35, 0
    %v37 = vld [vmem:[%s0] sm:$0xff]
    %v38 = vpack.c.bf16 %v37, %v37
    %vm39 = vcmask 27648
    %40 = vst.msk [vmem:[#allocation2] sm:$0xf] %vm39, %v38
    %v41 = vld [vmem:[#allocation2] sm:$0xf]
    %v42 = vld [vmem:[%s1] sm:$0xf]
    %v43 = vld [vmem:[%s2] sm:$0x1]
    %v45 = vlaneseq
    %v46 = vshrl.u32 %v45, 7
    %v47 = vsub.s32 0, %v46
    %v48 = vrot.slane %v43, %v47
    %vm50 = vcmask 64512
    %v52 = vsel %vm50, %v41, 0
    %vm54 = vcmask 1043456
    %v56 = vsel %vm54, %v42, 0
    %58 = vmatprep.subr.bf16.mxu0 0
    %59 = vmatpush1.bf16.msra.mxu0 %v56
    %60 = vmatprep.subr.bf16.mxu0 0
    %61 = vmatpush1.bf16.msra.mxu0 0
    %62 = vmatprep.subr.bf16.mxu0 0
    %63 = vmatpush1.bf16.msra.mxu0 0
    %64 = vmatprep.subr.bf16.mxu0 0
    %65 = vmatpush1.bf16.msra.mxu0 0
    %66 = vmatprep.subr.bf16.mxu0 0
    %67 = vmatpush1.bf16.msra.mxu0 0
    %68 = vmatprep.subr.bf16.mxu0 0
    %69 = vmatpush1.bf16.msra.mxu0 0
    %70 = vmatprep.subr.bf16.mxu0 0
    %71 = vmatpush1.bf16.msra.mxu0 0
    %72 = vmatprep.subr.bf16.mxu0 0
    %73 = vmatpush1.bf16.msra.mxu0 0
    %74 = vmatprep.subr.bf16.mxu0 0
    %75 = vmatpush1.bf16.msra.mxu0 0
    %76 = vmatprep.subr.bf16.mxu0 0
    %77 = vmatpush1.bf16.msra.mxu0 0
    %78 = vmatprep.subr.bf16.mxu0 0
    %79 = vmatpush1.bf16.msra.mxu0 0
    %80 = vmatprep.subr.bf16.mxu0 0
    %81 = vmatpush1.bf16.msra.mxu0 0
    %82 = vmatprep.subr.bf16.mxu0 0
    %83 = vmatpush1.bf16.msra.mxu0 0
    %84 = vmatprep.subr.bf16.mxu0 0
    %85 = vmatpush1.bf16.msra.mxu0 0
    %86 = vmatprep.subr.bf16.mxu0 0
    %87 = vmatpush1.bf16.msra.mxu0 0
    %88 = vmatprep.subr.bf16.mxu0 0
    %89 = vmatpush1.bf16.msra.mxu0 0
    %90 = vmatprep.mubr.bf16.mxu0 0
    %91 = vmatmul.mubr.bf16.gmra.mrb[0].mxu0 %v52
    %v92 = vpop.f32.mrb[0].mxu0
    %v93 = vadd.f32 %v48, %v92
    %v94 = vpop.f32.mrb[0].mxu0
    %v95 = vpop.f32.mrb[0].mxu0
    %v96 = vpop.f32.mrb[0].mxu0
    %97 = vdwg.mxu0
    %v98 = vmax.f32 %v93, 0.0
    %v99 = vpack.c.bf16 %v98, %v98
    %v100 = vld [vmem:[#allocation3] sm:$0xf]
    %v101 = vld [vmem:[#allocation3 + $0x4] sm:$0xf]
    %v102 = vld [vmem:[#allocation3 + $0x8] sm:$0xf]
    %v103 = vld [vmem:[#allocation3 + $0xc] sm:$0xf]
    %v104 = vld [vmem:[#allocation3 + $0x10] sm:$0xf]
    %v105 = vld [vmem:[#allocation3 + $0x14] sm:$0xf]
    %v106 = vld [vmem:[#allocation3 + $0x18] sm:$0xf]
    %v107 = vld [vmem:[#allocation3 + $0x1c] sm:$0xf]
    %v108 = vld [vmem:[#allocation3 + $0x20] sm:$0xf]
    %v109 = vld [vmem:[#allocation3 + $0x24] sm:$0xf]
    %v110 = vld [vmem:[#allocation3 + $0x28] sm:$0xf]
    %v111 = vld [vmem:[#allocation3 + $0x2c] sm:$0xf]
    %v112 = vld [vmem:[#allocation3 + $0x30] sm:$0xf]
    %v113 = vld [vmem:[#allocation3 + $0x34] sm:$0xf]
    %v114 = vld [vmem:[#allocation3 + $0x38] sm:$0xf]
    %v115 = vld [vmem:[#allocation3 + $0x3c] sm:$0xf]
    %v116 = vld [vmem:[%s4] sm:$0x1]
    %v118 = vlaneseq
    %v119 = vshrl.u32 %v118, 7
    %v120 = vsub.s32 0, %v119
    %v121 = vrot.slane %v116, %v120
    %v139 = vunpack.c.l.b16 %v100
    %v140 = vunpack.c.l.b16 %v101
    %v141 = vunpack.c.l.b16 %v102
    %v142 = vunpack.c.l.b16 %v103
    %v143 = vunpack.c.l.b16 %v104
    %v144 = vunpack.c.l.b16 %v105
    %v145 = vunpack.c.l.b16 %v106
    %v146 = vunpack.c.l.b16 %v107
    %v147 = vunpack.c.l.b16 %v108
    %v148 = vunpack.c.l.b16 %v109
    %v149 = vunpack.c.l.b16 %v110
    %v150 = vunpack.c.l.b16 %v111
    %v151 = vunpack.c.l.b16 %v112
    %v152 = vunpack.c.l.b16 %v113
    %v153 = vunpack.c.l.b16 %v114
    %v154 = vunpack.c.l.b16 %v115
    %v155 = vpack.c.b16 %v140, %v139
    %v156 = vpack.c.b16 %v142, %v141
    %v157 = vpack.c.b16 %v144, %v143
    %v158 = vpack.c.b16 %v146, %v145
    %v159 = vpack.c.b16 %v148, %v147
    %v160 = vpack.c.b16 %v150, %v149
    %v161 = vpack.c.b16 %v152, %v151
    %v162 = vpack.c.b16 %v154, %v153
    %171 = vmatprep.subr.bf16.mxu0 0
    %172 = vmatpush1.bf16.msra.mxu0 %v155
    %173 = vmatprep.subr.bf16.mxu0 0
    %174 = vmatpush1.bf16.msra.mxu0 %v156
    %175 = vmatprep.subr.bf16.mxu0 0
    %176 = vmatpush1.bf16.msra.mxu0 %v157
    %177 = vmatprep.subr.bf16.mxu0 0
    %178 = vmatpush1.bf16.msra.mxu0 %v158
    %179 = vmatprep.subr.bf16.mxu0 0
    %180 = vmatpush1.bf16.msra.mxu0 %v159
    %181 = vmatprep.subr.bf16.mxu0 0
    %182 = vmatpush1.bf16.msra.mxu0 %v160
    %183 = vmatprep.subr.bf16.mxu0 0
    %184 = vmatpush1.bf16.msra.mxu0 %v161
    %185 = vmatprep.subr.bf16.mxu0 0
    %186 = vmatpush1.bf16.msra.mxu0 %v162
    %187 = vmatprep.subr.bf16.mxu0 0
    %188 = vmatpush1.bf16.msra.mxu0 0
    %189 = vmatprep.subr.bf16.mxu0 0
    %190 = vmatpush1.bf16.msra.mxu0 0
    %191 = vmatprep.subr.bf16.mxu0 0
    %192 = vmatpush1.bf16.msra.mxu0 0
    %193 = vmatprep.subr.bf16.mxu0 0
    %194 = vmatpush1.bf16.msra.mxu0 0
    %195 = vmatprep.subr.bf16.mxu0 0
    %196 = vmatpush1.bf16.msra.mxu0 0
    %197 = vmatprep.subr.bf16.mxu0 0
    %198 = vmatpush1.bf16.msra.mxu0 0
    %199 = vmatprep.subr.bf16.mxu0 0
    %200 = vmatpush1.bf16.msra.mxu0 0
    %201 = vmatprep.subr.bf16.mxu0 0
    %202 = vmatpush1.bf16.msra.mxu0 0
    %203 = vmatprep.mubr.bf16.mxu0 0
    %204 = vmatmul.mubr.bf16.gmra.mrb[0].mxu0 %v99
    %v205 = vpop.f32.mrb[0].mxu0
    %v206 = vadd.f32 %v121, %v205
    %v207 = vpop.f32.mrb[0].mxu0
    %v208 = vpop.f32.mrb[0].mxu0
    %v209 = vpop.f32.mrb[0].mxu0
    %210 = vdwg.mxu0
    %vm211 = vcmask 15360
    %212 = vst.msk [vmem:[%s5] sm:$0xff] %vm211, %v206
    // Predicated region
    $region26: #{tpu_custom_call.1} parent=1 // pred_check
      _
    $region27: #{tpu_custom_call.1} parent=1 // pred_check_branch
      %214 = sbr.rel (0) target = $region29
    $region28: #{tpu_custom_call.1} parent=1 // pred_region
      _
    $region29: #{tpu_custom_call.1} parent=1 // pred_fallthru
      _
    // Predicated region
    $region30: #{tpu_custom_call.1} parent=1 // pred_check
      _
    $region31: #{tpu_custom_call.1} parent=1 // pred_check_branch
      %216 = sbr.rel (0) target = $region33
    $region32: #{tpu_custom_call.1} parent=1 // pred_region
      _
    $region33: #{tpu_custom_call.1} parent=1 // pred_fallthru
      _
    %217 = vsyncpa [#allocation4], 1

</llo_original>
